<compile_context>
chip_gen: v6e
topology: v6e:2x2x1
jax: 0.10.0
libtpu: 0.0.40
codegen_flags: <defaults>
</compile_context>

<pallas_src>
import functools

import jax
import jax.numpy as jnp
from jax.experimental import pallas as pl
from jax.experimental.pallas import tpu as pltpu


def fc_kernel(xt_ref, w1t_ref, b1_ref, w2t_ref, b2t_ref, o_ref, *, sub):
    # xt_ref : (12, BM)   transposed input tile ([gender ; betas]^T)
    # w1t_ref: (128, 12)  W1^T (resident)       b1_ref : (128, 1)
    # w2t_ref: (2, 128)   W2^T (resident)       b2t_ref: (2, 1)
    # o_ref  : (2, BM)    transposed output tile (lane-dense store)
    bm = o_ref.shape[1]
    w1t = w1t_ref[...]
    b1 = b1_ref[...]
    w2t = w2t_ref[...]
    b2t = b2t_ref[...]

    # Fused layer1+ReLU+layer2 per sub-tile: h stays in vregs, never in VMEM.
    for col in range(0, bm, sub):
        x_sub = xt_ref[:, col:col + sub]                                 # (12, sub)
        h = jnp.dot(w1t, x_sub, preferred_element_type=jnp.float32) + b1  # (128, sub)
        h = jnp.maximum(h, 0.0)                                          # ReLU (VPU)
        y = jnp.dot(w2t, h, preferred_element_type=jnp.float32) + b2t    # (2, sub)
        o_ref[:, col:col + sub] = y.astype(o_ref.dtype)


def _fc_jnp(batch_gender, batch_betas, params):
    """Pure-JAX reference / small-N fast path (same math as the kernel)."""
    w1, b1, w2, b2 = params
    x = jnp.concatenate(
        [batch_gender.astype(jnp.float32), batch_betas.astype(jnp.float32)],
        axis=1)
    h = jnp.maximum(x @ w1 + b1.reshape(1, -1), 0.0)
    y = h @ w2 + b2.reshape(1, -1)
    return y[:, 0:1], y[:, 1:2]


def _pick_bm(n, block_m):
    """Batch-tile size: multiple of 128, large, and >=2 grid steps when possible."""
    block_m = max(128, (block_m // 128) * 128)
    bm_full = pl.cdiv(n, 128) * 128          # whole batch, lane-aligned
    if bm_full <= 128:
        return 128
    if bm_full >= 2 * block_m:
        return block_m                       # many tiles of block_m
    half = pl.cdiv(bm_full, 2)               # split in two so both v7x TCs work
    if half <= 128:
        return 128
    return pl.cdiv(half, 256) * 256          # keep 256-aligned for the sub-loop


def fc_forward(batch_gender, batch_betas, params, *,
               block_m=4096, min_kernel_rows=1024):
    """Pallas implementation of FC.forward -> (weight_kg_est, height_m_est)."""
    n = batch_gender.shape[0]
    assert batch_gender.shape == (n, 2) and batch_betas.shape == (n, 10)

    # Small-N fast path: kernel dispatch + padding overhead can't be amortized.
    if n < min_kernel_rows:
        return _fc_jnp(batch_gender, batch_betas, params)

    w1, b1, w2, b2 = params
    w1t = w1.astype(jnp.float32).T                 # (128, 12)
    b1c = b1.astype(jnp.float32).reshape(128, 1)   # (128, 1)
    w2t = w2.astype(jnp.float32).T                 # (2, 128)
    b2c = b2.astype(jnp.float32).reshape(2, 1)     # (2, 1)

    # Merged, transposed input: x^T = [gender^T ; betas^T] -> (12, N).
    # One cheap mem-bound XLA pass; buys a single K=12 MXU contraction and a
    # lane-dense transposed output with no in-kernel transpose.
    xt = jnp.concatenate(
        [batch_gender.astype(jnp.float32).T,
         batch_betas.astype(jnp.float32).T], axis=0)

    bm = _pick_bm(n, block_m)
    n_pad = pl.cdiv(n, bm) * bm
    if n_pad != n:
        xt = jnp.pad(xt, ((0, 0), (0, n_pad - n)))

    sub = 256 if bm % 256 == 0 else 128            # (128, sub) f32 <= 32 vregs

    yt = pl.pallas_call(
        functools.partial(fc_kernel, sub=sub),
        out_shape=jax.ShapeDtypeStruct((2, n_pad), jnp.float32),
        grid_spec=pl.GridSpec(
            grid=(n_pad // bm,),
            in_specs=[
                pl.BlockSpec((12, bm), lambda i: (0, i)),    # x^T batch tile
                pl.BlockSpec((128, 12), lambda i: (0, 0)),   # W1^T (resident)
                pl.BlockSpec((128, 1), lambda i: (0, 0)),    # b1
                pl.BlockSpec((2, 128), lambda i: (0, 0)),    # W2^T (resident)
                pl.BlockSpec((2, 1), lambda i: (0, 0)),      # b2
            ],
            out_specs=pl.BlockSpec((2, bm), lambda i: (0, i)),
        ),
        compiler_params=pltpu.CompilerParams(
            dimension_semantics=("parallel",)),
    )(xt, w1t, b1c, w2t, b2c)

    # Padded columns carry bias-only garbage; slice back to the true N.
    batch_weight_kg_est = yt[0:1, :n].T   # (N, 1)
    batch_height_m_est = yt[1:2, :n].T    # (N, 1)
    return batch_weight_kg_est, batch_height_m_est


def init_params(key):
    """Deterministic init matching nn.Linear default (uniform +- 1/sqrt(fan_in))."""
    k1, k2, k3, k4 = jax.random.split(key, 4)
    bound1 = 1.0 / jnp.sqrt(12.0)
    bound2 = 1.0 / jnp.sqrt(128.0)
    w1 = jax.random.uniform(k1, (12, 128), jnp.float32, -bound1, bound1)
    b1 = jax.random.uniform(k2, (1, 128), jnp.float32, -bound1, bound1)
    w2 = jax.random.uniform(k3, (128, 2), jnp.float32, -bound2, bound2)
    b2 = jax.random.uniform(k4, (1, 2), jnp.float32, -bound2, bound2)
    return w1, b1, w2, b2


if __name__ == "__main__":
    key = jax.random.PRNGKey(0)
    kp, kg, kb = jax.random.split(key, 3)
    params = init_params(kp)

    def make_inputs(n, k):
        k1, k2 = jax.random.split(k)
        g = jax.random.uniform(k1, (n, 2), jnp.float32)
        b = jax.random.normal(k2, (n, 10), jnp.float32)
        return g, b

    # Tiny batch (fast path) and the same batch forced through the kernel.
    g8, b8 = make_inputs(8, kg)
    w_fast, h_fast = fc_forward(g8, b8, params)                      # jnp path
    w_k8, h_k8 = fc_forward(g8, b8, params, min_kernel_rows=0)       # kernel, 1 tile

    # Larger, non-128-aligned batch: multi-tile kernel path with padding.
    gL, bL = make_inputs(2051, kb)
    w_kL, h_kL = fc_forward(gL, bL, params)                          # kernel, 2 tiles

    jax.block_until_ready((w_fast, h_fast, w_k8, h_k8, w_kL, h_kL))

    # Pure-JAX references.
    w_r8, h_r8 = _fc_jnp(g8, b8, params)
    w_rL, h_rL = _fc_jnp(gL, bL, params)

    assert w_k8.shape == (8, 1) and h_k8.shape == (8, 1)
    assert w_kL.shape == (2051, 1) and h_kL.shape == (2051, 1)
    for got, ref in ((w_fast, w_r8), (h_fast, h_r8),
                     (w_k8, w_r8), (h_k8, h_r8),
                     (w_kL, w_rL), (h_kL, h_rL)):
        err = float(jnp.max(jnp.abs(got - ref)))
        assert jnp.allclose(got, ref, atol=1e-4, rtol=1e-5), err

    print("KERNEL_OK")
</pallas_src>

<mosaic_0001>
module attributes {stable_mosaic.version = 11 : i64} {
  func.func @fc_kernel(%arg0: i32, %arg1: memref<12x128xf32, #tpu.memory_space<vmem>>, %arg2: memref<128x12xf32, #tpu.memory_space<vmem>>, %arg3: memref<128x1xf32, #tpu.memory_space<vmem>>, %arg4: memref<2x128xf32, #tpu.memory_space<vmem>>, %arg5: memref<2x1xf32, #tpu.memory_space<vmem>>, %arg6: memref<2x128xf32, #tpu.memory_space<vmem>>) attributes {dimension_semantics = [#tpu.dimension_semantics<parallel>], iteration_bounds = array<i64: 1>, scalar_prefetch = 0 : i64, scratch_operands = 0 : i64, tpu.core_type = #tpu.core_type<tc>, window_params = [{transform_indices = @transform_0, window_bounds = array<i64: 12, 128>}, {pipeline_mode = #tpu.pipeline_mode<synchronous>, transform_indices = @transform_1, window_bounds = array<i64: 128, 12>}, {pipeline_mode = #tpu.pipeline_mode<synchronous>, transform_indices = @transform_2, window_bounds = array<i64: 128, 1>}, {pipeline_mode = #tpu.pipeline_mode<synchronous>, transform_indices = @transform_3, window_bounds = array<i64: 2, 128>}, {pipeline_mode = #tpu.pipeline_mode<synchronous>, transform_indices = @transform_4, window_bounds = array<i64: 2, 1>}, {transform_indices = @transform_5, window_bounds = array<i64: 2, 128>}]} {
    %c0 = arith.constant 0 : index
    %c0_0 = arith.constant 0 : index
    %0 = vector.load %arg2[%c0, %c0_0] : memref<128x12xf32, #tpu.memory_space<vmem>>, vector<128x12xf32>
    %c0_1 = arith.constant 0 : index
    %c0_2 = arith.constant 0 : index
    %1 = vector.load %arg3[%c0_1, %c0_2] : memref<128x1xf32, #tpu.memory_space<vmem>>, vector<128x1xf32>
    %c0_3 = arith.constant 0 : index
    %c0_4 = arith.constant 0 : index
    %2 = vector.load %arg4[%c0_3, %c0_4] : memref<2x128xf32, #tpu.memory_space<vmem>>, vector<2x128xf32>
    %c0_5 = arith.constant 0 : index
    %c0_6 = arith.constant 0 : index
    %3 = vector.load %arg5[%c0_5, %c0_6] : memref<2x1xf32, #tpu.memory_space<vmem>>, vector<2x1xf32>
    %c0_7 = arith.constant 0 : index
    %c0_8 = arith.constant 0 : index
    %4 = vector.load %arg1[%c0_7, %c0_8] : memref<12x128xf32, #tpu.memory_space<vmem>>, vector<12x128xf32>
    %cst = arith.constant dense<0.000000e+00> : vector<128x128xf32>
    %5 = tpu.matmul %0, %4, %cst {dimension_numbers = #tpu.dot_dimension_numbers<[1], [0], [0], [1], [0, 0, 1, 1], [], []>} : vector<128x12xf32>, vector<12x128xf32>, vector<128x128xf32> -> vector<128x128xf32>
    %6 = vector.broadcast %1 : vector<128x1xf32> to vector<128x128xf32>
    %7 = arith.addf %5, %6 : vector<128x128xf32>
    %cst_9 = arith.constant 0.000000e+00 : f32
    %8 = vector.broadcast %cst_9 : f32 to vector<128x128xf32>
    %9 = arith.maximumf %7, %8 : vector<128x128xf32>
    %cst_10 = arith.constant dense<0.000000e+00> : vector<2x128xf32>
    %10 = tpu.matmul %2, %9, %cst_10 {dimension_numbers = #tpu.dot_dimension_numbers<[1], [0], [0], [1], [0, 0, 1, 1], [], []>} : vector<2x128xf32>, vector<128x128xf32>, vector<2x128xf32> -> vector<2x128xf32>
    %11 = vector.broadcast %3 : vector<2x1xf32> to vector<2x128xf32>
    %12 = arith.addf %10, %11 : vector<2x128xf32>
    %c0_11 = arith.constant 0 : index
    %c0_12 = arith.constant 0 : index
    %13 = vector.load %arg6[%c0_11, %c0_12] : memref<2x128xf32, #tpu.memory_space<vmem>>, vector<2x128xf32>
    tpu.vector_store %arg6[%c0_11, %c0_12], %12 {strides = array<i32>} : memref<2x128xf32, #tpu.memory_space<vmem>>, vector<2x128xf32>,
    return
  }
  func.func @transform_0(%arg0: i32) -> (i32, i32) {
    %c0_i32 = arith.constant 0 : i32
    %c0_i32_0 = arith.constant 0 : i32
    return %c0_i32, %arg0 : i32, i32
  }
  func.func @transform_1(%arg0: i32) -> (i32, i32) {
    %c0_i32 = arith.constant 0 : i32
    %c0_i32_0 = arith.constant 0 : i32
    %c0_i32_1 = arith.constant 0 : i32
    return %c0_i32, %c0_i32_0 : i32, i32
  }
  func.func @transform_2(%arg0: i32) -> (i32, i32) {
    %c0_i32 = arith.constant 0 : i32
    %c0_i32_0 = arith.constant 0 : i32
    %c0_i32_1 = arith.constant 0 : i32
    return %c0_i32, %c0_i32_0 : i32, i32
  }
  func.func @transform_3(%arg0: i32) -> (i32, i32) {
    %c0_i32 = arith.constant 0 : i32
    %c0_i32_0 = arith.constant 0 : i32
    %c0_i32_1 = arith.constant 0 : i32
    return %c0_i32, %c0_i32_0 : i32, i32
  }
  func.func @transform_4(%arg0: i32) -> (i32, i32) {
    %c0_i32 = arith.constant 0 : i32
    %c0_i32_0 = arith.constant 0 : i32
    %c0_i32_1 = arith.constant 0 : i32
    return %c0_i32, %c0_i32_0 : i32, i32
  }
  func.func @transform_5(%arg0: i32) -> (i32, i32) {
    %c0_i32 = arith.constant 0 : i32
    %c0_i32_0 = arith.constant 0 : i32
    return %c0_i32, %arg0 : i32, i32
  }
}

</mosaic_0001>

<llo_original>
// kernel: tpu_custom_call.1
$region0: #{tpu_custom_call.1}
  #allocation0 [shape = 'u32[]', space=smem, size = 0x4, offset = 0x4, fixed_abs, tag = 'smem constant byte address 0x4 - core index']
  #allocation1 [shape = 'u32[144,128]{1,0:T(1,128)}', space=vmem, size = 0x12000, scoped, tag = 'internal scratch']
  %s0 = inlined_call_operand.vmem [shape: f32[12,128], index: 0, kind: input, shape index: {}]
  %s1 = inlined_call_operand.vmem [shape: f32[128,12], index: 1, kind: input, shape index: {}]
  %s2 = inlined_call_operand.vmem [shape: f32[128,1], index: 2, kind: input, shape index: {}]
  %s3 = inlined_call_operand.vmem [shape: f32[2,128], index: 3, kind: input, shape index: {}]
  %s4 = inlined_call_operand.vmem [shape: f32[2,1], index: 4, kind: input, shape index: {}]
  %s5 = inlined_call_operand.hbm [shape: f32[2,128], index: 5, kind: output, shape index: {}]
  %s6 = sld [smem:[#allocation0]]
  $region30: #{tpu_custom_call.1} parent=0
    _
  %s8 = ssub.s32 1, %s6
  %s9 = scalar_select 0, %s8, %s6
  $region1: #{tpu_custom_call.1} parent=0
    #allocation2 [shape = 'u8[1024]{0}', space=vmem, size = 0x400, scoped, tag = 'output window, operand 0, single buffered']
    #allocation3 [shape = 's32[1]{0}', space=sflag, size = 0x4, scoped, tag = 'scoped memory for tpu_custom_call.1']
    %10 = vsyncpa [#allocation3], 0
    // Predicated region
    $region2: #{tpu_custom_call.1} parent=1 // pred_check
      _
    $region3: #{tpu_custom_call.1} parent=1 // pred_check_branch
      %12 = sbr.rel (0) target = $region5
    $region4: #{tpu_custom_call.1} parent=1 // pred_region
      _
    $region5: #{tpu_custom_call.1} parent=1 // pred_fallthru
      _
    // Predicated region
    $region6: #{tpu_custom_call.1} parent=1 // pred_check
      _
    $region7: #{tpu_custom_call.1} parent=1 // pred_check_branch
      %14 = sbr.rel (0) target = $region9
    $region8: #{tpu_custom_call.1} parent=1 // pred_region
      _
    $region9: #{tpu_custom_call.1} parent=1 // pred_fallthru
      _
    // Predicated region
    $region10: #{tpu_custom_call.1} parent=1 // pred_check
      _
    $region11: #{tpu_custom_call.1} parent=1 // pred_check_branch
      %16 = sbr.rel (0) target = $region13
    $region12: #{tpu_custom_call.1} parent=1 // pred_region
      _
    $region13: #{tpu_custom_call.1} parent=1 // pred_fallthru
      _
    // Predicated region
    $region14: #{tpu_custom_call.1} parent=1 // pred_check
      _
    $region15: #{tpu_custom_call.1} parent=1 // pred_check_branch
      %18 = sbr.rel (0) target = $region17
    $region16: #{tpu_custom_call.1} parent=1 // pred_region
      _
    $region17: #{tpu_custom_call.1} parent=1 // pred_fallthru
      _
    // Predicated region
    $region18: #{tpu_custom_call.1} parent=1 // pred_check
      _
    $region19: #{tpu_custom_call.1} parent=1 // pred_check_branch
      %20 = sbr.rel (0) target = $region21
    $region20: #{tpu_custom_call.1} parent=1 // pred_region
      _
    $region21: #{tpu_custom_call.1} parent=1 // pred_fallthru
      _
    %v21 = vld [vmem:[%s1] sm:$0xff]
    %v22 = vld [vmem:[%s1 + $0x8] sm:$0xff]
    %v23 = vld [vmem:[%s1 + $0x10] sm:$0xff]
    %v24 = vld [vmem:[%s1 + $0x18] sm:$0xff]
    %v25 = vld [vmem:[%s1 + $0x20] sm:$0xff]
    %v26 = vld [vmem:[%s1 + $0x28] sm:$0xff]
    %v27 = vld [vmem:[%s1 + $0x30] sm:$0xff]
    %v28 = vld [vmem:[%s1 + $0x38] sm:$0xff]
    %v29 = vld [vmem:[%s1 + $0x40] sm:$0xff]
    %v30 = vld [vmem:[%s1 + $0x48] sm:$0xff]
    %v31 = vld [vmem:[%s1 + $0x50] sm:$0xff]
    %v32 = vld [vmem:[%s1 + $0x58] sm:$0xff]
    %v33 = vld [vmem:[%s1 + $0x60] sm:$0xff]
    %v34 = vld [vmem:[%s1 + $0x68] sm:$0xff]
    %v35 = vld [vmem:[%s1 + $0x70] sm:$0xff]
    %v36 = vld [vmem:[%s1 + $0x78] sm:$0xff]
    %v37 = vld [vmem:[%s2] sm:$0xff]
    %v38 = vld [vmem:[%s2 + $0x8] sm:$0xff]
    %v39 = vld [vmem:[%s2 + $0x10] sm:$0xff]
    %v40 = vld [vmem:[%s2 + $0x18] sm:$0xff]
    %v41 = vld [vmem:[%s2 + $0x20] sm:$0xff]
    %v42 = vld [vmem:[%s2 + $0x28] sm:$0xff]
    %v43 = vld [vmem:[%s2 + $0x30] sm:$0xff]
    %v44 = vld [vmem:[%s2 + $0x38] sm:$0xff]
    %v45 = vld [vmem:[%s2 + $0x40] sm:$0xff]
    %v46 = vld [vmem:[%s2 + $0x48] sm:$0xff]
    %v47 = vld [vmem:[%s2 + $0x50] sm:$0xff]
    %v48 = vld [vmem:[%s2 + $0x58] sm:$0xff]
    %v49 = vld [vmem:[%s2 + $0x60] sm:$0xff]
    %v50 = vld [vmem:[%s2 + $0x68] sm:$0xff]
    %v51 = vld [vmem:[%s2 + $0x70] sm:$0xff]
    %v52 = vld [vmem:[%s2 + $0x78] sm:$0xff]
    %v53 = vld [vmem:[%s3] sm:$0x3]
    %v54 = vld [vmem:[%s4] sm:$0x3]
    %v55 = vld [vmem:[%s0] sm:$0xff]
    %v56 = vld [vmem:[%s0 + $0x8] sm:$0xf]
    %58 = vset.pattern.permute.xlu0 0
    %59 = vperm.xlu0 %58, %v37
    %v60 = vpop.permute.xlu0 %59
    %63 = vset.pattern.permute.xlu0 0
    %64 = vperm.xlu0 %63, %v38
    %v65 = vpop.permute.xlu0 %64
    %68 = vset.pattern.permute.xlu0 0
    %69 = vperm.xlu0 %68, %v39
    %v70 = vpop.permute.xlu0 %69
    %73 = vset.pattern.permute.xlu0 0
    %74 = vperm.xlu0 %73, %v40
    %v75 = vpop.permute.xlu0 %74
    %78 = vset.pattern.permute.xlu0 0
    %79 = vperm.xlu0 %78, %v41
    %v80 = vpop.permute.xlu0 %79
    %83 = vset.pattern.permute.xlu0 0
    %84 = vperm.xlu0 %83, %v42
    %v85 = vpop.permute.xlu0 %84
    %88 = vset.pattern.permute.xlu0 0
    %89 = vperm.xlu0 %88, %v43
    %v90 = vpop.permute.xlu0 %89
    %93 = vset.pattern.permute.xlu0 0
    %94 = vperm.xlu0 %93, %v44
    %v95 = vpop.permute.xlu0 %94
    %98 = vset.pattern.permute.xlu0 0
    %99 = vperm.xlu0 %98, %v45
    %v100 = vpop.permute.xlu0 %99
    %103 = vset.pattern.permute.xlu0 0
    %104 = vperm.xlu0 %103, %v46
    %v105 = vpop.permute.xlu0 %104
    %108 = vset.pattern.permute.xlu0 0
    %109 = vperm.xlu0 %108, %v47
    %v110 = vpop.permute.xlu0 %109
    %113 = vset.pattern.permute.xlu0 0
    %114 = vperm.xlu0 %113, %v48
    %v115 = vpop.permute.xlu0 %114
    %118 = vset.pattern.permute.xlu0 0
    %119 = vperm.xlu0 %118, %v49
    %v120 = vpop.permute.xlu0 %119
    %123 = vset.pattern.permute.xlu0 0
    %124 = vperm.xlu0 %123, %v50
    %v125 = vpop.permute.xlu0 %124
    %128 = vset.pattern.permute.xlu0 0
    %129 = vperm.xlu0 %128, %v51
    %v130 = vpop.permute.xlu0 %129
    %133 = vset.pattern.permute.xlu0 0
    %134 = vperm.xlu0 %133, %v52
    %v135 = vpop.permute.xlu0 %134
    %vm137 = vcmask 97280
    %v139 = vsel %vm137, %v21, 0
    %v142 = vsel %vm137, %v22, 0
    %v145 = vsel %vm137, %v23, 0
    %v148 = vsel %vm137, %v24, 0
    %v151 = vsel %vm137, %v25, 0
    %v154 = vsel %vm137, %v26, 0
    %v157 = vsel %vm137, %v27, 0
    %v160 = vsel %vm137, %v28, 0
    %v163 = vsel %vm137, %v29, 0
    %v166 = vsel %vm137, %v30, 0
    %v169 = vsel %vm137, %v31, 0
    %v172 = vsel %vm137, %v32, 0
    %v175 = vsel %vm137, %v33, 0
    %v178 = vsel %vm137, %v34, 0
    %v181 = vsel %vm137, %v35, 0
    %v184 = vsel %vm137, %v36, 0
    %vm186 = vcmask 1043456
    %v188 = vsel %vm186, %v56, 0
    %190 = vmatprep.subr.mxu0 0.0
    %191 = vmatpush1.msra.mxu0 0.0
    %192 = vmatprep.subr.mxu0 0.0
    %193 = vmatpush1.msra.mxu0 0.0
    %194 = vmatprep.subr.mxu0 0.0
    %195 = vmatpush1.msra.mxu0 0.0
    %196 = vmatprep.subr.mxu0 0.0
    %197 = vmatpush1.msra.mxu0 0.0
    %198 = vmatprep.subr.mxu0 0.0
    %199 = vmatpush1.msra.mxu0 0.0
    %200 = vmatprep.subr.mxu0 0.0
    %201 = vmatpush1.msra.mxu0 0.0
    %202 = vmatprep.subr.mxu0 0.0
    %203 = vmatpush1.msra.mxu0 0.0
    %204 = vmatprep.subr.mxu0 0.0
    %205 = vmatpush1.msra.mxu0 0.0
    %206 = vmatprep.subr.mxu0 0.0
    %207 = vmatpush1.msra.mxu0 0.0
    %208 = vmatprep.subr.mxu0 0.0
    %209 = vmatpush1.msra.mxu0 0.0
    %210 = vmatprep.subr.mxu0 0.0
    %211 = vmatpush1.msra.mxu0 0.0
    %212 = vmatprep.subr.mxu0 0.0
    %213 = vmatpush1.msra.mxu0 0.0
    %214 = vmatprep.subr.mxu0 0.0
    %215 = vmatpush1.msra.mxu0 0.0
    %216 = vmatprep.subr.mxu0 0.0
    %217 = vmatpush1.msra.mxu0 0.0
    %218 = vmatprep.subr.mxu0 0.0
    %219 = vmatpush1.msra.mxu0 %v188
    %220 = vmatprep.subr.mxu0 0.0
    %221 = vmatpush1.msra.mxu0 %v55
    %222 = vmatprep.subr.mxu0 0.0
    %223 = vmatpush2.msra.mxu0 0.0
    %224 = vmatprep.subr.mxu0 0.0
    %225 = vmatpush2.msra.mxu0 0.0
    %226 = vmatprep.subr.mxu0 0.0
    %227 = vmatpush2.msra.mxu0 0.0
    %228 = vmatprep.subr.mxu0 0.0
    %229 = vmatpush2.msra.mxu0 0.0
    %230 = vmatprep.subr.mxu0 0.0
    %231 = vmatpush2.msra.mxu0 0.0
    %232 = vmatprep.subr.mxu0 0.0
    %233 = vmatpush2.msra.mxu0 0.0
    %234 = vmatprep.subr.mxu0 0.0
    %235 = vmatpush2.msra.mxu0 0.0
    %236 = vmatprep.subr.mxu0 0.0
    %237 = vmatpush2.msra.mxu0 0.0
    %238 = vmatprep.subr.mxu0 0.0
    %239 = vmatpush2.msra.mxu0 0.0
    %240 = vmatprep.subr.mxu0 0.0
    %241 = vmatpush2.msra.mxu0 0.0
    %242 = vmatprep.subr.mxu0 0.0
    %243 = vmatpush2.msra.mxu0 0.0
    %244 = vmatprep.subr.mxu0 0.0
    %245 = vmatpush2.msra.mxu0 0.0
    %246 = vmatprep.subr.mxu0 0.0
    %247 = vmatpush2.msra.mxu0 0.0
    %248 = vmatprep.subr.mxu0 0.0
    %249 = vmatpush2.msra.mxu0 0.0
    %250 = vmatprep.subr.mxu0 0.0
    %251 = vmatpush2.msra.mxu0 0.0
    %252 = vmatprep.subr.mxu0 0.0
    %253 = vmatpush2.msra.mxu0 0.0
    %254 = vmatprep.mubr.f32.mxu0 0.0
    %255 = vmatmul.mubr.f32.gmra.mxu0 %v139
    %v256 = vpop.f32.mrf.mxu0
    %v257 = vadd.f32 %v60, %v256
    %v258 = vpop.f32.mrf.mxu0
    %259 = vmatprep.mubr.f32.mxu0 0.0
    %260 = vmatmul.mubr.f32.gmra.mxu0 %v142
    %v261 = vpop.f32.mrf.mxu0
    %v262 = vadd.f32 %v65, %v261
    %v263 = vpop.f32.mrf.mxu0
    %264 = vmatprep.mubr.f32.mxu0 0.0
    %265 = vmatmul.mubr.f32.gmra.mxu0 %v145
    %v266 = vpop.f32.mrf.mxu0
    %v267 = vadd.f32 %v70, %v266
    %v268 = vpop.f32.mrf.mxu0
    %269 = vmatprep.mubr.f32.mxu0 0.0
    %270 = vmatmul.mubr.f32.gmra.mxu0 %v148
    %v271 = vpop.f32.mrf.mxu0
    %v272 = vadd.f32 %v75, %v271
    %v273 = vpop.f32.mrf.mxu0
    %274 = vmatprep.mubr.f32.mxu0 0.0
    %275 = vmatmul.mubr.f32.gmra.mxu0 %v151
    %v276 = vpop.f32.mrf.mxu0
    %v277 = vadd.f32 %v80, %v276
    %v278 = vpop.f32.mrf.mxu0
    %279 = vmatprep.mubr.f32.mxu0 0.0
    %280 = vmatmul.mubr.f32.gmra.mxu0 %v154
    %v281 = vpop.f32.mrf.mxu0
    %v282 = vadd.f32 %v85, %v281
    %v283 = vpop.f32.mrf.mxu0
    %284 = vmatprep.mubr.f32.mxu0 0.0
    %285 = vmatmul.mubr.f32.gmra.mxu0 %v157
    %v286 = vpop.f32.mrf.mxu0
    %v287 = vadd.f32 %v90, %v286
    %v288 = vpop.f32.mrf.mxu0
    %289 = vmatprep.mubr.f32.mxu0 0.0
    %290 = vmatmul.mubr.f32.gmra.mxu0 %v160
    %v291 = vpop.f32.mrf.mxu0
    %v292 = vadd.f32 %v95, %v291
    %v293 = vpop.f32.mrf.mxu0
    %294 = vmatprep.mubr.f32.mxu0 0.0
    %295 = vmatmul.mubr.f32.gmra.mxu0 %v163
    %v296 = vpop.f32.mrf.mxu0
    %v297 = vadd.f32 %v100, %v296
    %v298 = vpop.f32.mrf.mxu0
    %299 = vmatprep.mubr.f32.mxu0 0.0
    %300 = vmatmul.mubr.f32.gmra.mxu0 %v166
    %v301 = vpop.f32.mrf.mxu0
    %v302 = vadd.f32 %v105, %v301
    %v303 = vpop.f32.mrf.mxu0
    %304 = vmatprep.mubr.f32.mxu0 0.0
    %305 = vmatmul.mubr.f32.gmra.mxu0 %v169
    %v306 = vpop.f32.mrf.mxu0
    %v307 = vadd.f32 %v110, %v306
    %v308 = vpop.f32.mrf.mxu0
    %309 = vmatprep.mubr.f32.mxu0 0.0
    %310 = vmatmul.mubr.f32.gmra.mxu0 %v172
    %v311 = vpop.f32.mrf.mxu0
    %v312 = vadd.f32 %v115, %v311
    %v313 = vpop.f32.mrf.mxu0
    %314 = vmatprep.mubr.f32.mxu0 0.0
    %315 = vmatmul.mubr.f32.gmra.mxu0 %v175
    %v316 = vpop.f32.mrf.mxu0
    %v317 = vadd.f32 %v120, %v316
    %v318 = vpop.f32.mrf.mxu0
    %319 = vmatprep.mubr.f32.mxu0 0.0
    %320 = vmatmul.mubr.f32.gmra.mxu0 %v178
    %v321 = vpop.f32.mrf.mxu0
    %v322 = vadd.f32 %v125, %v321
    %v323 = vpop.f32.mrf.mxu0
    %324 = vmatprep.mubr.f32.mxu0 0.0
    %325 = vmatmul.mubr.f32.gmra.mxu0 %v181
    %v326 = vpop.f32.mrf.mxu0
    %v327 = vadd.f32 %v130, %v326
    %v328 = vpop.f32.mrf.mxu0
    %329 = vmatprep.mubr.f32.mxu0 0.0
    %330 = vmatmul.mubr.f32.gmra.mxu0 %v184
    %v331 = vpop.f32.mrf.mxu0
    %v332 = vadd.f32 %v135, %v331
    %v333 = vpop.f32.mrf.mxu0
    %334 = vdwg.mxu0
    %v335 = vmax.f32 %v257, 0.0
    %v336 = vmax.f32 %v262, 0.0
    %v337 = vmax.f32 %v267, 0.0
    %v338 = vmax.f32 %v272, 0.0
    %v339 = vmax.f32 %v277, 0.0
    %v340 = vmax.f32 %v282, 0.0
    %v341 = vmax.f32 %v287, 0.0
    %v342 = vmax.f32 %v292, 0.0
    %v343 = vmax.f32 %v297, 0.0
    %v344 = vmax.f32 %v302, 0.0
    %v345 = vmax.f32 %v307, 0.0
    %v346 = vmax.f32 %v312, 0.0
    %v347 = vmax.f32 %v317, 0.0
    %v348 = vmax.f32 %v322, 0.0
    %v349 = vmax.f32 %v327, 0.0
    %v350 = vmax.f32 %v332, 0.0
    %352 = vset.pattern.permute.xlu0 0
    %353 = vperm.xlu0 %352, %v54
    %v354 = vpop.permute.xlu0 %353
    %356 = vmatprep.subr.mxu0 0.0
    %357 = vmatpush1.msra.mxu0 %v350
    %358 = vmatprep.subr.mxu0 0.0
    %359 = vmatpush1.msra.mxu0 %v349
    %360 = vmatprep.subr.mxu0 0.0
    %361 = vmatpush1.msra.mxu0 %v348
    %362 = vmatprep.subr.mxu0 0.0
    %363 = vmatpush1.msra.mxu0 %v347
    %364 = vmatprep.subr.mxu0 0.0
    %365 = vmatpush1.msra.mxu0 %v346
    %366 = vmatprep.subr.mxu0 0.0
    %367 = vmatpush1.msra.mxu0 %v345
    %368 = vmatprep.subr.mxu0 0.0
    %369 = vmatpush1.msra.mxu0 %v344
    %370 = vmatprep.subr.mxu0 0.0
    %371 = vmatpush1.msra.mxu0 %v343
    %372 = vmatprep.subr.mxu0 0.0
    %373 = vmatpush1.msra.mxu0 %v342
    %374 = vmatprep.subr.mxu0 0.0
    %375 = vmatpush1.msra.mxu0 %v341
    %376 = vmatprep.subr.mxu0 0.0
    %377 = vmatpush1.msra.mxu0 %v340
    %378 = vmatprep.subr.mxu0 0.0
    %379 = vmatpush1.msra.mxu0 %v339
    %380 = vmatprep.subr.mxu0 0.0
    %381 = vmatpush1.msra.mxu0 %v338
    %382 = vmatprep.subr.mxu0 0.0
    %383 = vmatpush1.msra.mxu0 %v337
    %384 = vmatprep.subr.mxu0 0.0
    %385 = vmatpush1.msra.mxu0 %v336
    %386 = vmatprep.subr.mxu0 0.0
    %387 = vmatpush1.msra.mxu0 %v335
    %388 = vmatprep.subr.mxu0 0.0
    %389 = vmatpush2.msra.mxu0 0.0
    %390 = vmatprep.subr.mxu0 0.0
    %391 = vmatpush2.msra.mxu0 0.0
    %392 = vmatprep.subr.mxu0 0.0
    %393 = vmatpush2.msra.mxu0 0.0
    %394 = vmatprep.subr.mxu0 0.0
    %395 = vmatpush2.msra.mxu0 0.0
    %396 = vmatprep.subr.mxu0 0.0
    %397 = vmatpush2.msra.mxu0 0.0
    %398 = vmatprep.subr.mxu0 0.0
    %399 = vmatpush2.msra.mxu0 0.0
    %400 = vmatprep.subr.mxu0 0.0
    %401 = vmatpush2.msra.mxu0 0.0
    %402 = vmatprep.subr.mxu0 0.0
    %403 = vmatpush2.msra.mxu0 0.0
    %404 = vmatprep.subr.mxu0 0.0
    %405 = vmatpush2.msra.mxu0 0.0
    %406 = vmatprep.subr.mxu0 0.0
    %407 = vmatpush2.msra.mxu0 0.0
    %408 = vmatprep.subr.mxu0 0.0
    %409 = vmatpush2.msra.mxu0 0.0
    %410 = vmatprep.subr.mxu0 0.0
    %411 = vmatpush2.msra.mxu0 0.0
    %412 = vmatprep.subr.mxu0 0.0
    %413 = vmatpush2.msra.mxu0 0.0
    %414 = vmatprep.subr.mxu0 0.0
    %415 = vmatpush2.msra.mxu0 0.0
    %416 = vmatprep.subr.mxu0 0.0
    %417 = vmatpush2.msra.mxu0 0.0
    %418 = vmatprep.subr.mxu0 0.0
    %419 = vmatpush2.msra.mxu0 0.0
    %420 = vmatprep.mubr.f32.mxu0 0.0
    %421 = vmatmul.mubr.f32.gmra.mxu0 %v53
    %v422 = vpop.f32.mrf.mxu0
    %v423 = vadd.f32 %v354, %v422
    %v424 = vpop.f32.mrf.mxu0
    %425 = vdwg.mxu0
    %426 = vst [vmem:[#allocation2] sm:$0x3] %v423
    // Predicated region
    $region22: #{tpu_custom_call.1} parent=1 // pred_check
      _
    $region23: #{tpu_custom_call.1} parent=1 // pred_check_branch
      %428 = sbr.rel (0) target = $region25
    $region24: #{tpu_custom_call.1} parent=1 // pred_region
      %s430 = ssub.s32 32, 32
      %431 = vsyncadd [#allocation3], %s430
      %s433 = sshll.u32 [#allocation2], 4
      %s434 = int_to_ptr.vmem [resolvable:$true] %s433
      %436 = dma.vmem_to_hbm [thread:$0]  %s434, 32, %s5, [#allocation3]
    $region25: #{tpu_custom_call.1} parent=1 // pred_fallthru
      _
    // Predicated region
    $region26: #{tpu_custom_call.1} parent=1 // pred_check
      _
    $region27: #{tpu_custom_call.1} parent=1 // pred_check_branch
      %438 = sbr.rel (0) target = $region29
    $region28: #{tpu_custom_call.1} parent=1 // pred_region
      %439 = dma.done [#allocation3], 32
    $region29: #{tpu_custom_call.1} parent=1 // pred_fallthru
      _
    %440 = vsyncpa [#allocation3], 1

</llo_original>
